<compile_context>
chip_gen: v7x
topology: tpu7x:2x2x1
jax: 0.10.0
libtpu: 0.0.40
codegen_flags: <defaults>
</compile_context>

<pallas_src>
import functools

import jax
import jax.numpy as jnp
from jax import lax
from jax.experimental import pallas as pl
from jax.experimental.pallas import tpu as pltpu


def _round_up(x, m):
    return ((x + m - 1) // m) * m


_VMEM_LIMIT_BYTES = 48 * 1024 * 1024  # > 32 MiB default, < v7x 64 MiB physical


# --------------------------------------------------------------------------- #
# Kernels
# --------------------------------------------------------------------------- #
def _lora_kernel(x_ref, wa_t_ref, gamma_ref, wb_t_ref, o_ref, h_acc, *, eps):
    # Grid: (M_tiles, K_tiles). K (= d_in) is the reduction axis ("arbitrary").
    # x_ref:     (TM, TK)           slice of x
    # wa_t_ref:  (TK, r)            slice of lora_a.weight.T
    # gamma_ref: (1, r)             lora_norm.weight
    # wb_t_ref:  (r, d_out_pad)     lora_b.weight.T (resident; tiny)
    # o_ref:     (TM, d_out_pad)
    # h_acc:     (TM, r) f32 scratch accumulator for the first matmul
    k = pl.program_id(1)

    @pl.when(k == 0)
    def _():
        h_acc[...] = jnp.zeros_like(h_acc)

    # First matmul in the operand's native dtype; MXU accumulates in f32.
    h_acc[...] += jnp.dot(x_ref[...], wa_t_ref[...],
                          preferred_element_type=jnp.float32)

    @pl.when(k == pl.num_programs(1) - 1)
    def _():
        h = h_acc[...]                                  # (TM, r) f32
        inv_r = 1.0 / h.shape[-1]                       # compile-time constant
        ms = jnp.sum(h * h, axis=-1, keepdims=True) * inv_r
        h = h * lax.rsqrt(ms + eps)                     # rsqrt -> EUP slot
        h = h * gamma_ref[...].astype(jnp.float32)
        y = jnp.dot(h.astype(wb_t_ref.dtype), wb_t_ref[...],
                    preferred_element_type=jnp.float32)
        o_ref[...] = y.astype(o_ref.dtype)


def _plain_kernel(x_ref, w_t_ref, o_ref, acc_ref):
    # Grid: (M_tiles, N_tiles, K_tiles); K is the reduction axis.
    # x_ref: (TM, TK), w_t_ref: (TK, TN), o_ref: (TM, TN), acc_ref: (TM, TN) f32
    k = pl.program_id(2)

    @pl.when(k == 0)
    def _():
        acc_ref[...] = jnp.zeros_like(acc_ref)

    acc_ref[...] += jnp.dot(x_ref[...], w_t_ref[...],
                            preferred_element_type=jnp.float32)

    @pl.when(k == pl.num_programs(2) - 1)
    def _():
        o_ref[...] = acc_ref[...].astype(o_ref.dtype)


# --------------------------------------------------------------------------- #
# Parameter preparation (outside jit: transposes done once at setup time)
# --------------------------------------------------------------------------- #
def prepare_lora_params(wa, gamma, wb):
    """wa: (r, d_in), gamma: (r,), wb: (d_out, r) in PyTorch layout."""
    return {"wa_t": jnp.asarray(wa).T,          # (d_in, r)
            "gamma": jnp.asarray(gamma),        # (r,)
            "wb_t": jnp.asarray(wb).T}          # (r, d_out)


def prepare_linear_params(w):
    """w: (d_out, d_in) in PyTorch layout."""
    return {"w_t": jnp.asarray(w).T}            # (d_in, d_out)


# --------------------------------------------------------------------------- #
# Forward
# --------------------------------------------------------------------------- #
@functools.partial(jax.jit, static_argnames=("block_m", "block_n", "block_k"))
def lora_linear_forward(x, params, block_m=256, block_n=256, block_k=512):
    """Forward pass of LoRALinear.

    x: (..., input_dim). Leading dims are flattened into rows for the kernel.
    params: dict with {"wa_t","gamma","wb_t"} (lora path) or {"w_t"} (plain path),
            from prepare_lora_params / prepare_linear_params.
    block_* defaults suit v6e/v7x; on v5e, block_m=128 also works (all tiles are
    multiples of 128 anyway).
    """
    orig_shape = x.shape
    d_in = orig_shape[-1]
    x2d = x.reshape(-1, d_in)
    m = x2d.shape[0]

    # Row tile: adapt down for tiny inputs, pad M up to a tile multiple.
    bm = min(block_m, _round_up(m, 8))
    m_pad = _round_up(m, bm)

    if "wa_t" in params:
        wa_t, gamma, wb_t = params["wa_t"], params["gamma"], params["wb_t"]
        r = wa_t.shape[1]
        d_out = wb_t.shape[1]

        tk = min(block_k, _round_up(d_in, 128))
        d_in_pad = _round_up(d_in, tk)
        d_out_pad = _round_up(d_out, 128)       # lane-dense output stores

        if m_pad != m or d_in_pad != d_in:
            x2d = jnp.pad(x2d, ((0, m_pad - m), (0, d_in_pad - d_in)))
        if d_in_pad != d_in:
            wa_t = jnp.pad(wa_t, ((0, d_in_pad - d_in), (0, 0)))
        if d_out_pad != d_out:
            wb_t = jnp.pad(wb_t, ((0, 0), (0, d_out_pad - d_out)))
        gamma2d = gamma.reshape(1, r)

        # torch.nn.RMSNorm(eps=None) uses finfo(input dtype).eps.
        eps = float(jnp.finfo(x.dtype).eps)

        grid = (m_pad // bm, d_in_pad // tk)
        out2d = pl.pallas_call(
            functools.partial(_lora_kernel, eps=eps),
            out_shape=jax.ShapeDtypeStruct((m_pad, d_out_pad), x.dtype),
            grid_spec=pltpu.PrefetchScalarGridSpec(
                num_scalar_prefetch=0,
                grid=grid,
                in_specs=[
                    pl.BlockSpec((bm, tk), lambda i, k: (i, k)),
                    pl.BlockSpec((tk, r), lambda i, k: (k, 0)),
                    pl.BlockSpec((1, r), lambda i, k: (0, 0)),
                    pl.BlockSpec((r, d_out_pad), lambda i, k: (0, 0)),
                ],
                out_specs=pl.BlockSpec((bm, d_out_pad), lambda i, k: (i, 0)),
                scratch_shapes=[pltpu.VMEM((bm, r), jnp.float32)],
            ),
            compiler_params=pltpu.CompilerParams(
                dimension_semantics=("parallel", "arbitrary"),
                vmem_limit_bytes=_VMEM_LIMIT_BYTES),
        )(x2d, wa_t, gamma2d, wb_t)
    else:
        w_t = params["w_t"]                     # (d_in, d_out)
        d_out = w_t.shape[1]

        tn = min(block_n, _round_up(d_out, 128))
        tk = min(block_k, _round_up(d_in, 128))
        d_out_pad = _round_up(d_out, tn)
        d_in_pad = _round_up(d_in, tk)

        if m_pad != m or d_in_pad != d_in:
            x2d = jnp.pad(x2d, ((0, m_pad - m), (0, d_in_pad - d_in)))
        if d_in_pad != d_in or d_out_pad != d_out:
            w_t = jnp.pad(w_t, ((0, d_in_pad - d_in), (0, d_out_pad - d_out)))

        grid = (m_pad // bm, d_out_pad // tn, d_in_pad // tk)
        out2d = pl.pallas_call(
            _plain_kernel,
            out_shape=jax.ShapeDtypeStruct((m_pad, d_out_pad), x.dtype),
            grid_spec=pltpu.PrefetchScalarGridSpec(
                num_scalar_prefetch=0,
                grid=grid,
                in_specs=[
                    pl.BlockSpec((bm, tk), lambda i, j, k: (i, k)),
                    pl.BlockSpec((tk, tn), lambda i, j, k: (k, j)),
                ],
                out_specs=pl.BlockSpec((bm, tn), lambda i, j, k: (i, j)),
                scratch_shapes=[pltpu.VMEM((bm, tn), jnp.float32)],
            ),
            compiler_params=pltpu.CompilerParams(
                dimension_semantics=("parallel", "parallel", "arbitrary"),
                vmem_limit_bytes=_VMEM_LIMIT_BYTES),
        )(x2d, w_t)

    out2d = out2d[:m, :d_out]
    return out2d.reshape(*orig_shape[:-1], d_out)


# --------------------------------------------------------------------------- #
# Pure-JAX reference (matches the PyTorch module)
# --------------------------------------------------------------------------- #
def _reference_forward(x, params):
    if "wa_t" in params:
        eps = float(jnp.finfo(x.dtype).eps)
        h = x @ params["wa_t"]
        ms = jnp.mean(h * h, axis=-1, keepdims=True)
        h = h * lax.rsqrt(ms + eps) * params["gamma"]
        return h @ params["wb_t"]
    return x @ params["w_t"]


if __name__ == "__main__":
    key = jax.random.PRNGKey(0)
    batch, seq = 2, 8
    input_dim, output_dim, lora_rank = 32, 32, 8

    k_x, k_a, k_b, k_w = jax.random.split(key, 4)

    x = jax.random.normal(k_x, (batch, seq, input_dim), dtype=jnp.float32)

    # Deterministic synthetic weights in PyTorch layout, pre-transposed once at setup.
    wa = jax.random.uniform(k_a, (lora_rank, input_dim), jnp.float32,
                            -1.0, 1.0) / jnp.sqrt(input_dim)
    gamma = jnp.ones((lora_rank,), jnp.float32)       # RMSNorm weight init = ones
    wb = jax.random.uniform(k_b, (output_dim, lora_rank), jnp.float32,
                            -1.0, 1.0) / jnp.sqrt(lora_rank)
    w = jax.random.uniform(k_w, (output_dim, input_dim), jnp.float32,
                           -1.0, 1.0) / jnp.sqrt(input_dim)

    lora_params = prepare_lora_params(wa, gamma, wb)
    plain_params = prepare_linear_params(w)

    # LoRA path
    out_lora = jax.block_until_ready(lora_linear_forward(x, lora_params))
    ref_lora = _reference_forward(x, lora_params)
    assert out_lora.shape == (batch, seq, output_dim)
    assert jnp.allclose(out_lora, ref_lora, atol=1e-5, rtol=1e-5)

    # Plain linear path (lora_rank=None)
    out_plain = jax.block_until_ready(lora_linear_forward(x, plain_params))
    ref_plain = _reference_forward(x, plain_params)
    assert out_plain.shape == (batch, seq, output_dim)
    assert jnp.allclose(out_plain, ref_plain, atol=1e-5, rtol=1e-5)

    print("KERNEL_OK")
</pallas_src>

<mosaic_0001>
module attributes {stable_mosaic.version = 11 : i64} {
  func.func @_lora_kernel(%arg0: i32, %arg1: i32, %arg2: memref<16x128xf32, #tpu.memory_space<vmem>>, %arg3: memref<128x8xf32, #tpu.memory_space<vmem>>, %arg4: memref<1x8xf32, #tpu.memory_space<vmem>>, %arg5: memref<8x128xf32, #tpu.memory_space<vmem>>, %arg6: memref<16x128xf32, #tpu.memory_space<vmem>>, %arg7: memref<16x8xf32, #tpu.memory_space<vmem>>) attributes {dimension_semantics = [#tpu.dimension_semantics<parallel>, #tpu.dimension_semantics<arbitrary>], iteration_bounds = array<i64: 1, 1>, scalar_prefetch = 0 : i64, scratch_operands = 1 : i64, tpu.core_type = #tpu.core_type<tc>, window_params = [{transform_indices = @transform_0, window_bounds = array<i64: 16, 128>}, {transform_indices = @transform_1, window_bounds = array<i64: 128, 8>}, {pipeline_mode = #tpu.pipeline_mode<synchronous>, transform_indices = @transform_2, window_bounds = array<i64: 1, 8>}, {pipeline_mode = #tpu.pipeline_mode<synchronous>, transform_indices = @transform_3, window_bounds = array<i64: 8, 128>}, {transform_indices = @transform_4, window_bounds = array<i64: 16, 128>}]} {
    %c0_i32 = arith.constant 0 : i32
    %0 = arith.cmpi eq, %arg1, %c0_i32 : i32
    %1 = arith.extui %0 : i1 to i32
    %c0_i32_0 = arith.constant 0 : i32
    %2 = arith.cmpi ne, %1, %c0_i32_0 : i32
    scf.if %2 {
      %cst_10 = arith.constant 0.000000e+00 : f32
      %12 = vector.broadcast %cst_10 : f32 to vector<16x8xf32>
      %c0_11 = arith.constant 0 : index
      %c0_12 = arith.constant 0 : index
      %13 = vector.load %arg7[%c0_11, %c0_12] : memref<16x8xf32, #tpu.memory_space<vmem>>, vector<16x8xf32>
      tpu.vector_store %arg7[%c0_11, %c0_12], %12 {strides = array<i32>} : memref<16x8xf32, #tpu.memory_space<vmem>>, vector<16x8xf32>,
    } else {
    }
    %c0 = arith.constant 0 : index
    %c0_1 = arith.constant 0 : index
    %3 = vector.load %arg7[%c0, %c0_1] : memref<16x8xf32, #tpu.memory_space<vmem>>, vector<16x8xf32>
    %c0_2 = arith.constant 0 : index
    %c0_3 = arith.constant 0 : index
    %4 = vector.load %arg2[%c0_2, %c0_3] : memref<16x128xf32, #tpu.memory_space<vmem>>, vector<16x128xf32>
    %c0_4 = arith.constant 0 : index
    %c0_5 = arith.constant 0 : index
    %5 = vector.load %arg3[%c0_4, %c0_5] : memref<128x8xf32, #tpu.memory_space<vmem>>, vector<128x8xf32>
    %cst = arith.constant dense<0.000000e+00> : vector<16x8xf32>
    %6 = tpu.matmul %4, %5, %cst {dimension_numbers = #tpu.dot_dimension_numbers<[1], [0], [0], [1], [0, 0, 1, 1], [], []>} : vector<16x128xf32>, vector<128x8xf32>, vector<16x8xf32> -> vector<16x8xf32>
    %7 = arith.addf %3, %6 : vector<16x8xf32>
    %c0_6 = arith.constant 0 : index
    %c0_7 = arith.constant 0 : index
    %8 = vector.load %arg7[%c0_6, %c0_7] : memref<16x8xf32, #tpu.memory_space<vmem>>, vector<16x8xf32>
    tpu.vector_store %arg7[%c0_6, %c0_7], %7 {strides = array<i32>} : memref<16x8xf32, #tpu.memory_space<vmem>>, vector<16x8xf32>,
    %c0_i32_8 = arith.constant 0 : i32
    %9 = arith.cmpi eq, %arg1, %c0_i32_8 : i32
    %10 = arith.extui %9 : i1 to i32
    %c0_i32_9 = arith.constant 0 : i32
    %11 = arith.cmpi ne, %10, %c0_i32_9 : i32
    scf.if %11 {
      %c0_10 = arith.constant 0 : index
      %c0_11 = arith.constant 0 : index
      %12 = vector.load %arg7[%c0_10, %c0_11] : memref<16x8xf32, #tpu.memory_space<vmem>>, vector<16x8xf32>
      %13 = arith.mulf %12, %12 : vector<16x8xf32>
      %cst_12 = arith.constant dense<0.000000e+00> : vector<16xf32>
      %14 = vector.multi_reduction <add>, %13, %cst_12 [1] : vector<16x8xf32> to vector<16xf32>
      %15 = vector.shape_cast %14 : vector<16xf32> to vector<16x1xf32>
      %cst_13 = arith.constant 1.250000e-01 : f32
      %16 = vector.broadcast %cst_13 : f32 to vector<16x1xf32>
      %17 = arith.mulf %15, %16 : vector<16x1xf32>
      %cst_14 = arith.constant 1.1920929E-7 : f32
      %18 = vector.broadcast %cst_14 : f32 to vector<16x1xf32>
      %19 = arith.addf %17, %18 : vector<16x1xf32>
      %20 = math.rsqrt %19 : vector<16x1xf32>
      %21 = vector.broadcast %20 : vector<16x1xf32> to vector<16x8xf32>
      %22 = arith.mulf %12, %21 : vector<16x8xf32>
      %c0_15 = arith.constant 0 : index
      %c0_16 = arith.constant 0 : index
      %23 = vector.load %arg4[%c0_15, %c0_16] : memref<1x8xf32, #tpu.memory_space<vmem>>, vector<1x8xf32>
      %24 = vector.broadcast %23 : vector<1x8xf32> to vector<16x8xf32>
      %25 = arith.mulf %22, %24 : vector<16x8xf32>
      %c0_17 = arith.constant 0 : index
      %c0_18 = arith.constant 0 : index
      %26 = vector.load %arg5[%c0_17, %c0_18] : memref<8x128xf32, #tpu.memory_space<vmem>>, vector<8x128xf32>
      %cst_19 = arith.constant dense<0.000000e+00> : vector<16x128xf32>
      %27 = tpu.matmul %25, %26, %cst_19 {dimension_numbers = #tpu.dot_dimension_numbers<[1], [0], [0], [1], [0, 0, 1, 1], [], []>} : vector<16x8xf32>, vector<8x128xf32>, vector<16x128xf32> -> vector<16x128xf32>
      %c0_20 = arith.constant 0 : index
      %c0_21 = arith.constant 0 : index
      %28 = vector.load %arg6[%c0_20, %c0_21] : memref<16x128xf32, #tpu.memory_space<vmem>>, vector<16x128xf32>
      tpu.vector_store %arg6[%c0_20, %c0_21], %27 {strides = array<i32>} : memref<16x128xf32, #tpu.memory_space<vmem>>, vector<16x128xf32>,
    } else {
    }
    return
  }
  func.func @transform_0(%arg0: i32, %arg1: i32) -> (i32, i32) {
    %c0_i32 = arith.constant 0 : i32
    return %arg0, %arg1 : i32, i32
  }
  func.func @transform_1(%arg0: i32, %arg1: i32) -> (i32, i32) {
    %c0_i32 = arith.constant 0 : i32
    %c0_i32_0 = arith.constant 0 : i32
    return %arg1, %c0_i32 : i32, i32
  }
  func.func @transform_2(%arg0: i32, %arg1: i32) -> (i32, i32) {
    %c0_i32 = arith.constant 0 : i32
    %c0_i32_0 = arith.constant 0 : i32
    %c0_i32_1 = arith.constant 0 : i32
    return %c0_i32, %c0_i32_0 : i32, i32
  }
  func.func @transform_3(%arg0: i32, %arg1: i32) -> (i32, i32) {
    %c0_i32 = arith.constant 0 : i32
    %c0_i32_0 = arith.constant 0 : i32
    %c0_i32_1 = arith.constant 0 : i32
    return %c0_i32, %c0_i32_0 : i32, i32
  }
  func.func @transform_4(%arg0: i32, %arg1: i32) -> (i32, i32) {
    %c0_i32 = arith.constant 0 : i32
    %c0_i32_0 = arith.constant 0 : i32
    return %arg0, %c0_i32 : i32, i32
  }
}

</mosaic_0001>

<llo_original>
// kernel: lora_linear_forward.1
$region0: #{lora_linear_forward.1}
  #allocation0 [shape = 'u32[]', space=smem, size = 0x4, offset = 0x4, fixed_abs, tag = 'smem constant byte address 0x4 - core index']
  #allocation1 [shape = 'u32[144,128]{1,0:T(1,128)}', space=vmem, size = 0x12000, scoped, tag = 'internal scratch']
  #allocation2 [shape = 'f32[16,8]{1,0:T(8,128)}', space=vmem, size = 0x2000, scoped, tag = 'scratch operand']
  %s0 = inlined_call_operand.vmem [shape: f32[16,128], index: 0, kind: input, shape index: {}]
  %s1 = inlined_call_operand.vmem [shape: f32[128,8], index: 1, kind: input, shape index: {}]
  %s2 = inlined_call_operand.vmem [shape: f32[1,8], index: 2, kind: input, shape index: {}]
  %s3 = inlined_call_operand.vmem [shape: f32[8,128], index: 3, kind: input, shape index: {}]
  %s4 = inlined_call_operand.vmem [shape: f32[16,128], index: 4, kind: output, shape index: {}]
  %s5 = sld [smem:[#allocation0]]
  $region34: #{lora_linear_forward.1} parent=0
    _
  %s7 = ssub.s32 1, %s5
  %s8 = scalar_select 0, %s7, %s5
  // Predicated region
  $region2: #{lora_linear_forward.1} parent=0 // pred_check
    _
  $region3: #{lora_linear_forward.1} parent=0 // pred_check_branch
    %10 = sbr.rel (0) target = $region5
  $region4: #{lora_linear_forward.1} parent=0 // pred_region
    _
  $region5: #{lora_linear_forward.1} parent=0 // pred_fallthru
    _
  // Predicated region
  $region6: #{lora_linear_forward.1} parent=0 // pred_check
    _
  $region7: #{lora_linear_forward.1} parent=0 // pred_check_branch
    %12 = sbr.rel (0) target = $region9
  $region8: #{lora_linear_forward.1} parent=0 // pred_region
    _
  $region9: #{lora_linear_forward.1} parent=0 // pred_fallthru
    _
  // Predicated region
  $region10: #{lora_linear_forward.1} parent=0 // pred_check
    _
  $region11: #{lora_linear_forward.1} parent=0 // pred_check_branch
    %14 = sbr.rel (0) target = $region13
  $region12: #{lora_linear_forward.1} parent=0 // pred_region
    _
  $region13: #{lora_linear_forward.1} parent=0 // pred_fallthru
    _
  // Predicated region
  $region14: #{lora_linear_forward.1} parent=0 // pred_check
    _
  $region15: #{lora_linear_forward.1} parent=0 // pred_check_branch
    %16 = sbr.rel (0) target = $region17
  $region16: #{lora_linear_forward.1} parent=0 // pred_region
    _
  $region17: #{lora_linear_forward.1} parent=0 // pred_fallthru
    _
  %p17 = scmp.eq.s32.totalorder 0, 0
  // Predicated region
  $region18: #{lora_linear_forward.1} parent=0 // pred_check
    %p18 = pneg %p17
  $region19: #{lora_linear_forward.1} parent=0 // pred_check_branch
    %20 = sbr.rel (%p18) target = $region21
  $region20: #{lora_linear_forward.1} parent=0 // pred_region
    %vm21 = vcmask 64512
    %22 = vst.msk [vmem:[#allocation2] sm:$0xff] %vm21, 0.0
    %23 = vst.msk [vmem:[#allocation2 + $0x8] sm:$0xff] %vm21, 0.0
  $region21: #{lora_linear_forward.1} parent=0 // pred_fallthru
    _
  %v24 = vld [vmem:[#allocation2] sm:$0xff]
  %v25 = vld [vmem:[#allocation2 + $0x8] sm:$0xff]
  %v26 = vld [vmem:[%s0] sm:$0xff]
  %v27 = vld [vmem:[%s0 + $0x8] sm:$0xff]
  %v28 = vld [vmem:[%s1] sm:$0xff]
  %v29 = vld [vmem:[%s1 + $0x8] sm:$0xff]
  %v30 = vld [vmem:[%s1 + $0x10] sm:$0xff]
  %v31 = vld [vmem:[%s1 + $0x18] sm:$0xff]
  %v32 = vld [vmem:[%s1 + $0x20] sm:$0xff]
  %v33 = vld [vmem:[%s1 + $0x28] sm:$0xff]
  %v34 = vld [vmem:[%s1 + $0x30] sm:$0xff]
  %v35 = vld [vmem:[%s1 + $0x38] sm:$0xff]
  %v36 = vld [vmem:[%s1 + $0x40] sm:$0xff]
  %v37 = vld [vmem:[%s1 + $0x48] sm:$0xff]
  %v38 = vld [vmem:[%s1 + $0x50] sm:$0xff]
  %v39 = vld [vmem:[%s1 + $0x58] sm:$0xff]
  %v40 = vld [vmem:[%s1 + $0x60] sm:$0xff]
  %v41 = vld [vmem:[%s1 + $0x68] sm:$0xff]
  %v42 = vld [vmem:[%s1 + $0x70] sm:$0xff]
  %v43 = vld [vmem:[%s1 + $0x78] sm:$0xff]
  %44 = vmatprep.subr.mxu0 0.0
  %45 = vmatpush1.msra.mxu0 %v28
  %46 = vmatprep.subr.mxu0 0.0
  %47 = vmatpush1.msra.mxu0 %v29
  %48 = vmatprep.subr.mxu0 0.0
  %49 = vmatpush1.msra.mxu0 %v30
  %50 = vmatprep.subr.mxu0 0.0
  %51 = vmatpush1.msra.mxu0 %v31
  %52 = vmatprep.subr.mxu0 0.0
  %53 = vmatpush1.msra.mxu0 %v32
  %54 = vmatprep.subr.mxu0 0.0
  %55 = vmatpush1.msra.mxu0 %v33
  %56 = vmatprep.subr.mxu0 0.0
  %57 = vmatpush1.msra.mxu0 %v34
  %58 = vmatprep.subr.mxu0 0.0
  %59 = vmatpush1.msra.mxu0 %v35
  %60 = vmatprep.subr.mxu0 0.0
  %61 = vmatpush1.msra.mxu0 %v36
  %62 = vmatprep.subr.mxu0 0.0
  %63 = vmatpush1.msra.mxu0 %v37
  %64 = vmatprep.subr.mxu0 0.0
  %65 = vmatpush1.msra.mxu0 %v38
  %66 = vmatprep.subr.mxu0 0.0
  %67 = vmatpush1.msra.mxu0 %v39
  %68 = vmatprep.subr.mxu0 0.0
  %69 = vmatpush1.msra.mxu0 %v40
  %70 = vmatprep.subr.mxu0 0.0
  %71 = vmatpush1.msra.mxu0 %v41
  %72 = vmatprep.subr.mxu0 0.0
  %73 = vmatpush1.msra.mxu0 %v42
  %74 = vmatprep.subr.mxu0 0.0
  %75 = vmatpush1.msra.mxu0 %v43
  %76 = vmatprep.subr.mxu0 0.0
  %77 = vmatpush1.msra.mxu0 0.0
  %78 = vmatprep.subr.mxu0 0.0
  %79 = vmatpush1.msra.mxu0 0.0
  %80 = vmatprep.subr.mxu0 0.0
  %81 = vmatpush1.msra.mxu0 0.0
  %82 = vmatprep.subr.mxu0 0.0
  %83 = vmatpush1.msra.mxu0 0.0
  %84 = vmatprep.subr.mxu0 0.0
  %85 = vmatpush1.msra.mxu0 0.0
  %86 = vmatprep.subr.mxu0 0.0
  %87 = vmatpush1.msra.mxu0 0.0
  %88 = vmatprep.subr.mxu0 0.0
  %89 = vmatpush1.msra.mxu0 0.0
  %90 = vmatprep.subr.mxu0 0.0
  %91 = vmatpush1.msra.mxu0 0.0
  %92 = vmatprep.subr.mxu0 0.0
  %93 = vmatpush1.msra.mxu0 0.0
  %94 = vmatprep.subr.mxu0 0.0
  %95 = vmatpush1.msra.mxu0 0.0
  %96 = vmatprep.subr.mxu0 0.0
  %97 = vmatpush1.msra.mxu0 0.0
  %98 = vmatprep.subr.mxu0 0.0
  %99 = vmatpush1.msra.mxu0 0.0
  %100 = vmatprep.subr.mxu0 0.0
  %101 = vmatpush1.msra.mxu0 0.0
  %102 = vmatprep.subr.mxu0 0.0
  %103 = vmatpush1.msra.mxu0 0.0
  %104 = vmatprep.subr.mxu0 0.0
  %105 = vmatpush1.msra.mxu0 0.0
  %106 = vmatprep.subr.mxu0 0.0
  %107 = vmatpush1.msra.mxu0 0.0
  %108 = vmatprep.mubr.f32.mxu0 0.0
  %109 = vmatmul.mubr.f32.gmra.mrb[0].mxu0 %v26
  %v110 = vpop.f32.mrb[0].mxu0
  %v111 = vadd.f32 0.0, %v110
  %v112 = vpop.f32.mrb[0].mxu0
  %113 = vmatprep.mubr.f32.mxu0 0.0
  %114 = vmatmul.mubr.f32.gmra.mrb[0].mxu0 %v27
  %v115 = vpop.f32.mrb[0].mxu0
  %v116 = vadd.f32 0.0, %v115
  %v117 = vpop.f32.mrb[0].mxu0
  %118 = vdwg.mxu0
  %v119 = vadd.f32 %v24, %v111
  %v120 = vadd.f32 %v25, %v116
  %vm121 = vcmask 64512
  %122 = vst.msk [vmem:[#allocation2] sm:$0xff] %vm121, %v119
  %123 = vst.msk [vmem:[#allocation2 + $0x8] sm:$0xff] %vm121, %v120
  // Predicated region
  $region22: #{lora_linear_forward.1} parent=0 // pred_check
    %p124 = pneg %p17
  $region23: #{lora_linear_forward.1} parent=0 // pred_check_branch
    %126 = sbr.rel (%p124) target = $region25
  $region24: #{lora_linear_forward.1} parent=0 // pred_region
    %v127 = vld [vmem:[#allocation2] sm:$0xff]
    %v128 = vld [vmem:[#allocation2 + $0x8] sm:$0xff]
    %v129 = vmul.f32 %v127, %v127
    %v130 = vmul.f32 %v128, %v128
    %v131 = vsel %vm121, %v129, 0.0
    %132 = vadd.xlane.f32.xlu0 %v131
    %v133 = vpop.xlane.xlu0 %132
    %v134 = vsel %vm121, %v130, 0.0
    %135 = vadd.xlane.f32.xlu0 %v134
    %v136 = vpop.xlane.xlu0 %135
    %v137 = vmul.f32 %v133, 0.125
    %v138 = vmul.f32 %v136, 0.125
    %v139 = vadd.f32 %v137, 1.1920929e-07
    %v140 = vadd.f32 %v138, 1.1920929e-07
    %v141 = vrsqrt.pop %v139
    %v142 = vrsqrt.pop %v140
    %v143 = vmul.f32 %v127, %v141
    %v144 = vmul.f32 %v128, %v142
    %v145 = vld [vmem:[%s2] sm:$0x1]
    %v147 = vlaneseq
    %v148 = vshrl.u32 %v147, 7
    %v149 = vsub.s32 0, %v148
    %v150 = vrot.slane %v145, %v149
    %v152 = vmul.f32 %v143, %v150
    %v153 = vmul.f32 %v144, %v150
    %v154 = vld [vmem:[%s3] sm:$0xff]
    %v156 = vsel %vm121, %v152, 0
    %v159 = vsel %vm121, %v153, 0
    %161 = vmatprep.subr.mxu0 0.0
    %162 = vmatpush1.msra.mxu0 %v154
    %163 = vmatprep.subr.mxu0 0.0
    %164 = vmatpush1.msra.mxu0 0.0
    %165 = vmatprep.subr.mxu0 0.0
    %166 = vmatpush1.msra.mxu0 0.0
    %167 = vmatprep.subr.mxu0 0.0
    %168 = vmatpush1.msra.mxu0 0.0
    %169 = vmatprep.subr.mxu0 0.0
    %170 = vmatpush1.msra.mxu0 0.0
    %171 = vmatprep.subr.mxu0 0.0
    %172 = vmatpush1.msra.mxu0 0.0
    %173 = vmatprep.subr.mxu0 0.0
    %174 = vmatpush1.msra.mxu0 0.0
    %175 = vmatprep.subr.mxu0 0.0
    %176 = vmatpush1.msra.mxu0 0.0
    %177 = vmatprep.subr.mxu0 0.0
    %178 = vmatpush1.msra.mxu0 0.0
    %179 = vmatprep.subr.mxu0 0.0
    %180 = vmatpush1.msra.mxu0 0.0
    %181 = vmatprep.subr.mxu0 0.0
    %182 = vmatpush1.msra.mxu0 0.0
    %183 = vmatprep.subr.mxu0 0.0
    %184 = vmatpush1.msra.mxu0 0.0
    %185 = vmatprep.subr.mxu0 0.0
    %186 = vmatpush1.msra.mxu0 0.0
    %187 = vmatprep.subr.mxu0 0.0
    %188 = vmatpush1.msra.mxu0 0.0
    %189 = vmatprep.subr.mxu0 0.0
    %190 = vmatpush1.msra.mxu0 0.0
    %191 = vmatprep.subr.mxu0 0.0
    %192 = vmatpush1.msra.mxu0 0.0
    %193 = vmatprep.subr.mxu0 0.0
    %194 = vmatpush1.msra.mxu0 0.0
    %195 = vmatprep.subr.mxu0 0.0
    %196 = vmatpush1.msra.mxu0 0.0
    %197 = vmatprep.subr.mxu0 0.0
    %198 = vmatpush1.msra.mxu0 0.0
    %199 = vmatprep.subr.mxu0 0.0
    %200 = vmatpush1.msra.mxu0 0.0
    %201 = vmatprep.subr.mxu0 0.0
    %202 = vmatpush1.msra.mxu0 0.0
    %203 = vmatprep.subr.mxu0 0.0
    %204 = vmatpush1.msra.mxu0 0.0
    %205 = vmatprep.subr.mxu0 0.0
    %206 = vmatpush1.msra.mxu0 0.0
    %207 = vmatprep.subr.mxu0 0.0
    %208 = vmatpush1.msra.mxu0 0.0
    %209 = vmatprep.subr.mxu0 0.0
    %210 = vmatpush1.msra.mxu0 0.0
    %211 = vmatprep.subr.mxu0 0.0
    %212 = vmatpush1.msra.mxu0 0.0
    %213 = vmatprep.subr.mxu0 0.0
    %214 = vmatpush1.msra.mxu0 0.0
    %215 = vmatprep.subr.mxu0 0.0
    %216 = vmatpush1.msra.mxu0 0.0
    %217 = vmatprep.subr.mxu0 0.0
    %218 = vmatpush1.msra.mxu0 0.0
    %219 = vmatprep.subr.mxu0 0.0
    %220 = vmatpush1.msra.mxu0 0.0
    %221 = vmatprep.subr.mxu0 0.0
    %222 = vmatpush1.msra.mxu0 0.0
    %223 = vmatprep.subr.mxu0 0.0
    %224 = vmatpush1.msra.mxu0 0.0
    %225 = vmatprep.mubr.f32.mxu0 0.0
    %226 = vmatmul.mubr.f32.gmra.mrb[0].mxu0 %v156
    %v227 = vpop.f32.mrb[0].mxu0
    %v228 = vadd.f32 0.0, %v227
    %v229 = vpop.f32.mrb[0].mxu0
    %230 = vmatprep.mubr.f32.mxu0 0.0
    %231 = vmatmul.mubr.f32.gmra.mrb[0].mxu0 %v159
    %v232 = vpop.f32.mrb[0].mxu0
    %v233 = vadd.f32 0.0, %v232
    %v234 = vpop.f32.mrb[0].mxu0
    %235 = vdwg.mxu0
    %236 = vst [vmem:[%s4] sm:$0xff] %v228
    %237 = vst [vmem:[%s4 + $0x8] sm:$0xff] %v233
  $region25: #{lora_linear_forward.1} parent=0 // pred_fallthru
    _
  // Predicated region
  $region26: #{lora_linear_forward.1} parent=0 // pred_check
    _
  $region27: #{lora_linear_forward.1} parent=0 // pred_check_branch
    %239 = sbr.rel (0) target = $region29
  $region28: #{lora_linear_forward.1} parent=0 // pred_region
    _
  $region29: #{lora_linear_forward.1} parent=0 // pred_fallthru
    _
  // Predicated region
  $region30: #{lora_linear_forward.1} parent=0 // pred_check
    _
  $region31: #{lora_linear_forward.1} parent=0 // pred_check_branch
    %241 = sbr.rel (0) target = $region33
  $region32: #{lora_linear_forward.1} parent=0 // pred_region
    _
  $region33: #{lora_linear_forward.1} parent=0 // pred_fallthru
    _

</llo_original>
